<compile_context>
chip_gen: v7x
topology: tpu7x:2x2x1
jax: 0.10.0
libtpu: 0.0.40
codegen_flags: <defaults>
</compile_context>

<pallas_src>
import functools

import jax
import jax.numpy as jnp
import numpy as np
from jax.experimental import pallas as pl
from jax.experimental.pallas import tpu as pltpu

_SLACK = 8  # zero padding on each end of the flattened spatial axis (halo slack)


def _make_kernel(wp: int, out_len: int):
    """wp = padded width (W+2); out_len = row_tile * wp (per-tile output lanes)."""

    def kernel(x_ref, w1_ref, w2_ref, b1_ref, b2_ref, o_ref):
        # x_ref: (1, C_in, R) bf16, R = (row_tile+2)*wp + 2*_SLACK
        x = x_ref[0]
        c_out = o_ref.shape[1]
        acc = jnp.zeros((c_out, out_len), jnp.float32)
        # 3x3 conv (padding=1) == sum of 9 shifted matmuls over the flat tile.
        for kh in range(3):
            for kw in range(3):
                shift = _SLACK + kh * wp + (kw - 1)
                patch = x[:, shift:shift + out_len]          # (C_in, out_len) bf16
                acc += jnp.dot(w1_ref[kh * 3 + kw], patch,
                               preferred_element_type=jnp.float32)
        h = jnp.maximum(acc + b1_ref[...], 0.0)              # bias + ReLU (f32)
        y = jnp.dot(w2_ref[...], h,                          # 1x1 conv (f32)
                    preferred_element_type=jnp.float32) + b2_ref[...]
        o_ref[0] = jax.nn.sigmoid(y) + 1.0                   # sigmoid, then +1

    return kernel


@functools.partial(jax.jit, static_argnames=("row_tile",))
def attention2d(x, conv1_w, conv1_b, conv2_w, conv2_b, row_tile=None):
    """x: (N, C_in, H, W); conv1_w: (C_out, C_in, 3, 3); conv2_w: (C_out, C_out, 1, 1)."""
    N, C_in, H, W = x.shape
    C_out = conv1_w.shape[0]
    wp = W + 2

    if row_tile is None:
        row_tile = max(8, 4096 // wp)          # keep ~2-4K output lanes per tile
    th = max(1, min(int(row_tile), H))
    n_th = pl.cdiv(H, th)
    h_pad = n_th * th
    out_len = th * wp
    flat_len = (th + 2) * wp
    full_len = flat_len + 2 * _SLACK
    n_tiles = N * n_th

    # Spatial zero-pad (conv padding=1) + pad rows up to a row-tile multiple.
    xp = jnp.pad(x, ((0, 0), (0, 0), (1, h_pad - H + 1), (1, 1)))
    xp = xp.astype(jnp.bfloat16)               # (N, C_in, h_pad+2, W+2)

    # Overlapping row windows (2-row halo), flattened to (C_in, rows*cols),
    # with _SLACK zero lanes on each end so all 9 shifted slices stay in range.
    tiles = jnp.stack(
        [xp[:, :, i * th:i * th + th + 2, :] for i in range(n_th)], axis=1)
    tiles = tiles.reshape(n_tiles, C_in, flat_len)
    tiles = jnp.pad(tiles, ((0, 0), (0, 0), (_SLACK, _SLACK)))

    # Weights as matmul matrices: w1_t[kh*3+kw, co, ci] = conv1_w[co, ci, kh, kw].
    w1_t = jnp.transpose(conv1_w, (2, 3, 0, 1)).reshape(9, C_out, C_in)
    w1_t = w1_t.astype(jnp.bfloat16)
    w2_t = conv2_w[:, :, 0, 0].astype(jnp.float32)            # (C_out, C_out)
    b1 = conv1_b.reshape(C_out, 1).astype(jnp.float32)
    b2 = conv2_b.reshape(C_out, 1).astype(jnp.float32)

    out = pl.pallas_call(
        _make_kernel(wp, out_len),
        out_shape=jax.ShapeDtypeStruct((n_tiles, C_out, out_len), jnp.float32),
        grid=(n_tiles,),
        in_specs=[
            pl.BlockSpec((1, C_in, full_len), lambda i: (i, 0, 0)),
            pl.BlockSpec((9, C_out, C_in), lambda i: (0, 0, 0)),
            pl.BlockSpec((C_out, C_out), lambda i: (0, 0)),
            pl.BlockSpec((C_out, 1), lambda i: (0, 0)),
            pl.BlockSpec((C_out, 1), lambda i: (0, 0)),
        ],
        out_specs=pl.BlockSpec((1, C_out, out_len), lambda i: (i, 0, 0)),
        compiler_params=pltpu.CompilerParams(
            dimension_semantics=("parallel",),
            vmem_limit_bytes=32 * 1024 * 1024,
        ),
    )(tiles, w1_t, w2_t, b1, b2)

    # (n_tiles, C_out, th*wp) -> (N, C_out, H, W): drop halo columns / pad rows.
    out = out.reshape(N, n_th, C_out, th, wp)[:, :, :, :, 1:W + 1]
    out = jnp.transpose(out, (0, 2, 1, 3, 4)).reshape(N, C_out, h_pad, W)
    return out[:, :, :H, :]


def attention2d_ref(x, conv1_w, conv1_b, conv2_w, conv2_b):
    """Pure-JAX f32 reference (matches PyTorch semantics)."""
    dn = ("NCHW", "OIHW", "NCHW")
    y = jax.lax.conv_general_dilated(x, conv1_w, (1, 1), "SAME", dimension_numbers=dn)
    y = y + conv1_b[None, :, None, None]
    y = jnp.maximum(y, 0.0)
    y = jax.lax.conv_general_dilated(y, conv2_w, (1, 1), "SAME", dimension_numbers=dn)
    y = y + conv2_b[None, :, None, None]
    return jax.nn.sigmoid(y) + 1.0


if __name__ == "__main__":
    # Small shapes consistent with the module: N=2, C_in=4, H=W=16, C_out=8.
    N, C_in, H, W, C_out = 2, 4, 16, 16, 8

    key = jax.random.PRNGKey(0)
    k_x, k_w1, k_b1, k_w2, k_b2 = jax.random.split(key, 5)

    x = jax.random.normal(k_x, (N, C_in, H, W), dtype=jnp.float32)
    conv1_w = jax.random.normal(k_w1, (C_out, C_in, 3, 3), dtype=jnp.float32) * 0.1
    conv1_b = jax.random.normal(k_b1, (C_out,), dtype=jnp.float32) * 0.1
    conv2_w = jax.random.normal(k_w2, (C_out, C_out, 1, 1), dtype=jnp.float32) * 0.1
    conv2_b = jax.random.normal(k_b2, (C_out,), dtype=jnp.float32) * 0.1

    # row_tile=8 -> 2 row-tiles per image x 2 images = 4 grid steps (exercises
    # the halo handling and the pipelined multi-tile path).
    out = attention2d(x, conv1_w, conv1_b, conv2_w, conv2_b, row_tile=8)
    out = jax.block_until_ready(out)

    ref = attention2d_ref(x, conv1_w, conv1_b, conv2_w, conv2_b)
    assert out.shape == (N, C_out, H, W), out.shape
    err = float(np.max(np.abs(np.asarray(out) - np.asarray(ref))))
    # bf16 input/weight casts on the 3x3 conv => small tolerance vs the f32 ref.
    assert err < 2e-2, f"max abs err {err}"

    print("KERNEL_OK")
</pallas_src>

<mosaic_0001>
module attributes {stable_mosaic.version = 11 : i64} {
  func.func @kernel(%arg0: i32, %arg1: memref<1x4x196xbf16, #tpu.memory_space<vmem>>, %arg2: memref<9x8x4xbf16, #tpu.memory_space<vmem>>, %arg3: memref<8x8xf32, #tpu.memory_space<vmem>>, %arg4: memref<8x1xf32, #tpu.memory_space<vmem>>, %arg5: memref<8x1xf32, #tpu.memory_space<vmem>>, %arg6: memref<1x8x144xf32, #tpu.memory_space<vmem>>) attributes {dimension_semantics = [#tpu.dimension_semantics<parallel>], iteration_bounds = array<i64: 4>, scalar_prefetch = 0 : i64, scratch_operands = 0 : i64, tpu.core_type = #tpu.core_type<tc>, window_params = [{transform_indices = @transform_0, window_bounds = array<i64: 1, 4, 196>}, {pipeline_mode = #tpu.pipeline_mode<synchronous>, transform_indices = @transform_1, window_bounds = array<i64: 9, 8, 4>}, {pipeline_mode = #tpu.pipeline_mode<synchronous>, transform_indices = @transform_2, window_bounds = array<i64: 8, 8>}, {pipeline_mode = #tpu.pipeline_mode<synchronous>, transform_indices = @transform_3, window_bounds = array<i64: 8, 1>}, {pipeline_mode = #tpu.pipeline_mode<synchronous>, transform_indices = @transform_4, window_bounds = array<i64: 8, 1>}, {transform_indices = @transform_5, window_bounds = array<i64: 1, 8, 144>}]} {
    %c0 = arith.constant 0 : index
    %c0_0 = arith.constant 0 : index
    %c0_1 = arith.constant 0 : index
    %0 = vector.load %arg1[%c0, %c0_0, %c0_1] : memref<1x4x196xbf16, #tpu.memory_space<vmem>>, vector<1x4x196xbf16>
    %1 = vector.shape_cast %0 : vector<1x4x196xbf16> to vector<4x196xbf16>
    %cst = arith.constant 0.000000e+00 : f32
    %2 = vector.broadcast %cst : f32 to vector<8x144xf32>
    %3 = vector.extract_strided_slice %1 {offsets = [0, 7], sizes = [4, 144], strides = [1, 1]} : vector<4x196xbf16> to vector<4x144xbf16>
    %c0_2 = arith.constant 0 : index
    %c0_3 = arith.constant 0 : index
    %c0_4 = arith.constant 0 : index
    %4 = vector.load %arg2[%c0_2, %c0_3, %c0_4] : memref<9x8x4xbf16, #tpu.memory_space<vmem>>, vector<1x8x4xbf16>
    %5 = vector.shape_cast %4 : vector<1x8x4xbf16> to vector<8x4xbf16>
    %cst_5 = arith.constant dense<0.000000e+00> : vector<8x144xf32>
    %6 = tpu.matmul %5, %3, %cst_5 {dimension_numbers = #tpu.dot_dimension_numbers<[1], [0], [0], [1], [0, 0, 1, 1], [], []>} : vector<8x4xbf16>, vector<4x144xbf16>, vector<8x144xf32> -> vector<8x144xf32>
    %7 = arith.addf %2, %6 : vector<8x144xf32>
    %8 = vector.extract_strided_slice %1 {offsets = [0, 8], sizes = [4, 144], strides = [1, 1]} : vector<4x196xbf16> to vector<4x144xbf16>
    %c1 = arith.constant 1 : index
    %c0_6 = arith.constant 0 : index
    %c0_7 = arith.constant 0 : index
    %9 = vector.load %arg2[%c1, %c0_6, %c0_7] : memref<9x8x4xbf16, #tpu.memory_space<vmem>>, vector<1x8x4xbf16>
    %10 = vector.shape_cast %9 : vector<1x8x4xbf16> to vector<8x4xbf16>
    %cst_8 = arith.constant dense<0.000000e+00> : vector<8x144xf32>
    %11 = tpu.matmul %10, %8, %cst_8 {dimension_numbers = #tpu.dot_dimension_numbers<[1], [0], [0], [1], [0, 0, 1, 1], [], []>} : vector<8x4xbf16>, vector<4x144xbf16>, vector<8x144xf32> -> vector<8x144xf32>
    %12 = arith.addf %7, %11 : vector<8x144xf32>
    %13 = vector.extract_strided_slice %1 {offsets = [0, 9], sizes = [4, 144], strides = [1, 1]} : vector<4x196xbf16> to vector<4x144xbf16>
    %c2 = arith.constant 2 : index
    %c0_9 = arith.constant 0 : index
    %c0_10 = arith.constant 0 : index
    %14 = vector.load %arg2[%c2, %c0_9, %c0_10] : memref<9x8x4xbf16, #tpu.memory_space<vmem>>, vector<1x8x4xbf16>
    %15 = vector.shape_cast %14 : vector<1x8x4xbf16> to vector<8x4xbf16>
    %cst_11 = arith.constant dense<0.000000e+00> : vector<8x144xf32>
    %16 = tpu.matmul %15, %13, %cst_11 {dimension_numbers = #tpu.dot_dimension_numbers<[1], [0], [0], [1], [0, 0, 1, 1], [], []>} : vector<8x4xbf16>, vector<4x144xbf16>, vector<8x144xf32> -> vector<8x144xf32>
    %17 = arith.addf %12, %16 : vector<8x144xf32>
    %18 = vector.extract_strided_slice %1 {offsets = [0, 25], sizes = [4, 144], strides = [1, 1]} : vector<4x196xbf16> to vector<4x144xbf16>
    %c3 = arith.constant 3 : index
    %c0_12 = arith.constant 0 : index
    %c0_13 = arith.constant 0 : index
    %19 = vector.load %arg2[%c3, %c0_12, %c0_13] : memref<9x8x4xbf16, #tpu.memory_space<vmem>>, vector<1x8x4xbf16>
    %20 = vector.shape_cast %19 : vector<1x8x4xbf16> to vector<8x4xbf16>
    %cst_14 = arith.constant dense<0.000000e+00> : vector<8x144xf32>
    %21 = tpu.matmul %20, %18, %cst_14 {dimension_numbers = #tpu.dot_dimension_numbers<[1], [0], [0], [1], [0, 0, 1, 1], [], []>} : vector<8x4xbf16>, vector<4x144xbf16>, vector<8x144xf32> -> vector<8x144xf32>
    %22 = arith.addf %17, %21 : vector<8x144xf32>
    %23 = vector.extract_strided_slice %1 {offsets = [0, 26], sizes = [4, 144], strides = [1, 1]} : vector<4x196xbf16> to vector<4x144xbf16>
    %c4 = arith.constant 4 : index
    %c0_15 = arith.constant 0 : index
    %c0_16 = arith.constant 0 : index
    %24 = vector.load %arg2[%c4, %c0_15, %c0_16] : memref<9x8x4xbf16, #tpu.memory_space<vmem>>, vector<1x8x4xbf16>
    %25 = vector.shape_cast %24 : vector<1x8x4xbf16> to vector<8x4xbf16>
    %cst_17 = arith.constant dense<0.000000e+00> : vector<8x144xf32>
    %26 = tpu.matmul %25, %23, %cst_17 {dimension_numbers = #tpu.dot_dimension_numbers<[1], [0], [0], [1], [0, 0, 1, 1], [], []>} : vector<8x4xbf16>, vector<4x144xbf16>, vector<8x144xf32> -> vector<8x144xf32>
    %27 = arith.addf %22, %26 : vector<8x144xf32>
    %28 = vector.extract_strided_slice %1 {offsets = [0, 27], sizes = [4, 144], strides = [1, 1]} : vector<4x196xbf16> to vector<4x144xbf16>
    %c5 = arith.constant 5 : index
    %c0_18 = arith.constant 0 : index
    %c0_19 = arith.constant 0 : index
    %29 = vector.load %arg2[%c5, %c0_18, %c0_19] : memref<9x8x4xbf16, #tpu.memory_space<vmem>>, vector<1x8x4xbf16>
    %30 = vector.shape_cast %29 : vector<1x8x4xbf16> to vector<8x4xbf16>
    %cst_20 = arith.constant dense<0.000000e+00> : vector<8x144xf32>
    %31 = tpu.matmul %30, %28, %cst_20 {dimension_numbers = #tpu.dot_dimension_numbers<[1], [0], [0], [1], [0, 0, 1, 1], [], []>} : vector<8x4xbf16>, vector<4x144xbf16>, vector<8x144xf32> -> vector<8x144xf32>
    %32 = arith.addf %27, %31 : vector<8x144xf32>
    %33 = vector.extract_strided_slice %1 {offsets = [0, 43], sizes = [4, 144], strides = [1, 1]} : vector<4x196xbf16> to vector<4x144xbf16>
    %c6 = arith.constant 6 : index
    %c0_21 = arith.constant 0 : index
    %c0_22 = arith.constant 0 : index
    %34 = vector.load %arg2[%c6, %c0_21, %c0_22] : memref<9x8x4xbf16, #tpu.memory_space<vmem>>, vector<1x8x4xbf16>
    %35 = vector.shape_cast %34 : vector<1x8x4xbf16> to vector<8x4xbf16>
    %cst_23 = arith.constant dense<0.000000e+00> : vector<8x144xf32>
    %36 = tpu.matmul %35, %33, %cst_23 {dimension_numbers = #tpu.dot_dimension_numbers<[1], [0], [0], [1], [0, 0, 1, 1], [], []>} : vector<8x4xbf16>, vector<4x144xbf16>, vector<8x144xf32> -> vector<8x144xf32>
    %37 = arith.addf %32, %36 : vector<8x144xf32>
    %38 = vector.extract_strided_slice %1 {offsets = [0, 44], sizes = [4, 144], strides = [1, 1]} : vector<4x196xbf16> to vector<4x144xbf16>
    %c7 = arith.constant 7 : index
    %c0_24 = arith.constant 0 : index
    %c0_25 = arith.constant 0 : index
    %39 = vector.load %arg2[%c7, %c0_24, %c0_25] : memref<9x8x4xbf16, #tpu.memory_space<vmem>>, vector<1x8x4xbf16>
    %40 = vector.shape_cast %39 : vector<1x8x4xbf16> to vector<8x4xbf16>
    %cst_26 = arith.constant dense<0.000000e+00> : vector<8x144xf32>
    %41 = tpu.matmul %40, %38, %cst_26 {dimension_numbers = #tpu.dot_dimension_numbers<[1], [0], [0], [1], [0, 0, 1, 1], [], []>} : vector<8x4xbf16>, vector<4x144xbf16>, vector<8x144xf32> -> vector<8x144xf32>
    %42 = arith.addf %37, %41 : vector<8x144xf32>
    %43 = vector.extract_strided_slice %1 {offsets = [0, 45], sizes = [4, 144], strides = [1, 1]} : vector<4x196xbf16> to vector<4x144xbf16>
    %c8 = arith.constant 8 : index
    %c0_27 = arith.constant 0 : index
    %c0_28 = arith.constant 0 : index
    %44 = vector.load %arg2[%c8, %c0_27, %c0_28] : memref<9x8x4xbf16, #tpu.memory_space<vmem>>, vector<1x8x4xbf16>
    %45 = vector.shape_cast %44 : vector<1x8x4xbf16> to vector<8x4xbf16>
    %cst_29 = arith.constant dense<0.000000e+00> : vector<8x144xf32>
    %46 = tpu.matmul %45, %43, %cst_29 {dimension_numbers = #tpu.dot_dimension_numbers<[1], [0], [0], [1], [0, 0, 1, 1], [], []>} : vector<8x4xbf16>, vector<4x144xbf16>, vector<8x144xf32> -> vector<8x144xf32>
    %47 = arith.addf %42, %46 : vector<8x144xf32>
    %c0_30 = arith.constant 0 : index
    %c0_31 = arith.constant 0 : index
    %48 = vector.load %arg4[%c0_30, %c0_31] : memref<8x1xf32, #tpu.memory_space<vmem>>, vector<8x1xf32>
    %49 = vector.broadcast %48 : vector<8x1xf32> to vector<8x144xf32>
    %50 = arith.addf %47, %49 : vector<8x144xf32>
    %cst_32 = arith.constant 0.000000e+00 : f32
    %51 = vector.broadcast %cst_32 : f32 to vector<8x144xf32>
    %52 = arith.maximumf %50, %51 : vector<8x144xf32>
    %c0_33 = arith.constant 0 : index
    %c0_34 = arith.constant 0 : index
    %53 = vector.load %arg3[%c0_33, %c0_34] : memref<8x8xf32, #tpu.memory_space<vmem>>, vector<8x8xf32>
    %cst_35 = arith.constant dense<0.000000e+00> : vector<8x144xf32>
    %54 = tpu.matmul %53, %52, %cst_35 {dimension_numbers = #tpu.dot_dimension_numbers<[1], [0], [0], [1], [0, 0, 1, 1], [], []>} : vector<8x8xf32>, vector<8x144xf32>, vector<8x144xf32> -> vector<8x144xf32>
    %c0_36 = arith.constant 0 : index
    %c0_37 = arith.constant 0 : index
    %55 = vector.load %arg5[%c0_36, %c0_37] : memref<8x1xf32, #tpu.memory_space<vmem>>, vector<8x1xf32>
    %56 = vector.broadcast %55 : vector<8x1xf32> to vector<8x144xf32>
    %57 = arith.addf %54, %56 : vector<8x144xf32>
    %58 = arith.negf %57 : vector<8x144xf32>
    %59 = math.exp %58 : vector<8x144xf32>
    %cst_38 = arith.constant 1.000000e+00 : f32
    %60 = vector.broadcast %cst_38 : f32 to vector<8x144xf32>
    %61 = arith.addf %60, %59 : vector<8x144xf32>
    %62 = arith.divf %60, %61 : vector<8x144xf32>
    %cst_39 = arith.constant 1.000000e+00 : f32
    %63 = vector.broadcast %cst_39 : f32 to vector<8x144xf32>
    %64 = arith.addf %62, %63 : vector<8x144xf32>
    %c0_40 = arith.constant 0 : index
    %c0_41 = arith.constant 0 : index
    %c0_42 = arith.constant 0 : index
    %65 = vector.load %arg6[%c0_40, %c0_41, %c0_42] : memref<1x8x144xf32, #tpu.memory_space<vmem>>, vector<1x8x144xf32>
    %66 = vector.shape_cast %65 : vector<1x8x144xf32> to vector<8x144xf32>
    %67 = vector.shape_cast %64 : vector<8x144xf32> to vector<1x8x144xf32>
    tpu.vector_store %arg6[%c0_40, %c0_41, %c0_42], %67 {strides = array<i32>} : memref<1x8x144xf32, #tpu.memory_space<vmem>>, vector<1x8x144xf32>,
    return
  }
  func.func @transform_0(%arg0: i32) -> (i32, i32, i32) {
    %c0_i32 = arith.constant 0 : i32
    %c0_i32_0 = arith.constant 0 : i32
    %c0_i32_1 = arith.constant 0 : i32
    return %arg0, %c0_i32, %c0_i32_0 : i32, i32, i32
  }
  func.func @transform_1(%arg0: i32) -> (i32, i32, i32) {
    %c0_i32 = arith.constant 0 : i32
    %c0_i32_0 = arith.constant 0 : i32
    %c0_i32_1 = arith.constant 0 : i32
    %c0_i32_2 = arith.constant 0 : i32
    return %c0_i32, %c0_i32_0, %c0_i32_1 : i32, i32, i32
  }
  func.func @transform_2(%arg0: i32) -> (i32, i32) {
    %c0_i32 = arith.constant 0 : i32
    %c0_i32_0 = arith.constant 0 : i32
    %c0_i32_1 = arith.constant 0 : i32
    return %c0_i32, %c0_i32_0 : i32, i32
  }
  func.func @transform_3(%arg0: i32) -> (i32, i32) {
    %c0_i32 = arith.constant 0 : i32
    %c0_i32_0 = arith.constant 0 : i32
    %c0_i32_1 = arith.constant 0 : i32
    return %c0_i32, %c0_i32_0 : i32, i32
  }
  func.func @transform_4(%arg0: i32) -> (i32, i32) {
    %c0_i32 = arith.constant 0 : i32
    %c0_i32_0 = arith.constant 0 : i32
    %c0_i32_1 = arith.constant 0 : i32
    return %c0_i32, %c0_i32_0 : i32, i32
  }
  func.func @transform_5(%arg0: i32) -> (i32, i32, i32) {
    %c0_i32 = arith.constant 0 : i32
    %c0_i32_0 = arith.constant 0 : i32
    %c0_i32_1 = arith.constant 0 : i32
    return %arg0, %c0_i32, %c0_i32_0 : i32, i32, i32
  }
}

</mosaic_0001>

<llo_original>
// kernel: attention2d.1
$region0: #{attention2d.1}
  #allocation0 [shape = 'u32[]', space=smem, size = 0x4, offset = 0x4, fixed_abs, tag = 'smem constant byte address 0x4 - core index']
  #allocation1 [shape = 'u32[144,128]{1,0:T(1,128)}', space=vmem, size = 0x12000, scoped, tag = 'internal scratch']
  %s0 = inlined_call_operand.vmem [shape: bf16[4,4,196], index: 0, kind: input, shape index: {}]
  %s1 = inlined_call_operand.vmem [shape: bf16[9,8,4], index: 1, kind: input, shape index: {}]
  %s2 = inlined_call_operand.vmem [shape: f32[8,8], index: 2, kind: input, shape index: {}]
  %s3 = inlined_call_operand.vmem [shape: f32[8,1], index: 3, kind: input, shape index: {}]
  %s4 = inlined_call_operand.vmem [shape: f32[8,1], index: 4, kind: input, shape index: {}]
  %s5 = inlined_call_operand.vmem [shape: f32[4,8,144], index: 5, kind: output, shape index: {}]
  %s6 = sld [smem:[#allocation0]]
  $region53: #{attention2d.1} parent=0
    _
  %s8 = ssub.s32 1, %s6
  %s9 = scalar_select 0, %s8, %s6
  loop: start=0, step=1, limit=6
  $region2: #{attention2d.1} parent=0 // loop_pre_header
    _
  $region3: #{attention2d.1} parent=0 // loop_header
    %s11 = sphi 0, %s15
    %p12 = scmp.ge.s32.totalorder %s11, 6
    %s21 = sphi 0, %s23
    %s24 = sphi 0, %s21
    %s25 = sphi 0, %s24
    %s41 = sphi 0, %s25
    %s45 = sphi 0, %s45
    %s47 = sphi 0, %s45
    %s48 = sphi 0, %s47
    %s62 = sphi 0, %s48
    %s66 = sphi 0, %s66
    %s68 = sphi 0, %s66
    %s69 = sphi 0, %s68
    %s83 = sphi 0, %s69
    %s87 = sphi 0, %s87
    %s89 = sphi 0, %s87
    %s90 = sphi 0, %s89
    %s104 = sphi 0, %s90
    %s108 = sphi 0, %s108
    %s110 = sphi 0, %s108
    %s111 = sphi 0, %s110
    %s125 = sphi 0, %s111
    %s131 = sphi 0, %s133
    %s134 = sphi 0, %s131
    %s135 = sphi 0, %s134
    %s151 = sphi 0, %s135
  $region4: #{attention2d.1} parent=0 // loop_header_branch
    %14 = sbr.rel (%p12) target = $region8
  $region5: #{attention2d.1} parent=0 // loop_body
    %s16 = ssub.s32 %s11, 1
    %s17 = ssub.s32 %s11, 2
    %s18 = sadd.s32 %s11, 1
    %s19 = ssub.s32 %s11, %s18
    %p20 = scmp.eq.s32.totalorder %s19, 0
    %s22 = sadd.s32 %s21, 1
    %s23 = scalar_select %p20, %s21, %s22
    %p26 = pneg %p20
    %p27 = scmp.eq.s32.totalorder %s11, 3
    %p28 = por %p26, %p27
    %p29 = scmp.ne.s32.totalorder %s21, %s24
    %p30 = scmp.eq.s32.totalorder %s11, 0
    %p31 = por %p29, %p30
    %p32 = scmp.ne.s32.totalorder %s21, %s24
    %p33 = scmp.eq.s32.totalorder %s16, 3
    %p34 = por %p32, %p33
    %p35 = scmp.ne.s32.totalorder %s24, %s25
    %p36 = scmp.eq.s32.totalorder %s16, 0
    %p37 = por %p35, %p36
    %p38 = scmp.ne.s32.totalorder %s24, %s25
    %p39 = scmp.eq.s32.totalorder %s17, 3
    %p40 = por %p38, %p39
    %p42 = scmp.ne.s32.totalorder %s25, %s41
    %p43 = scmp.eq.s32.totalorder %s17, 0
    %p44 = por %p42, %p43
    %s46 = sadd.s32 %s45, 1
    %p49 = scmp.eq.s32.totalorder %s11, 3
    %p50 = scmp.ne.s32.totalorder %s45, %s47
    %p51 = scmp.eq.s32.totalorder %s11, 0
    %p52 = por %p50, %p51
    %p53 = scmp.ne.s32.totalorder %s45, %s47
    %p54 = scmp.eq.s32.totalorder %s16, 3
    %p55 = por %p53, %p54
    %p56 = scmp.ne.s32.totalorder %s47, %s48
    %p57 = scmp.eq.s32.totalorder %s16, 0
    %p58 = por %p56, %p57
    %p59 = scmp.ne.s32.totalorder %s47, %s48
    %p60 = scmp.eq.s32.totalorder %s17, 3
    %p61 = por %p59, %p60
    %p63 = scmp.ne.s32.totalorder %s48, %s62
    %p64 = scmp.eq.s32.totalorder %s17, 0
    %p65 = por %p63, %p64
    %s67 = sadd.s32 %s66, 1
    %p70 = scmp.eq.s32.totalorder %s11, 3
    %p71 = scmp.ne.s32.totalorder %s66, %s68
    %p72 = scmp.eq.s32.totalorder %s11, 0
    %p73 = por %p71, %p72
    %p74 = scmp.ne.s32.totalorder %s66, %s68
    %p75 = scmp.eq.s32.totalorder %s16, 3
    %p76 = por %p74, %p75
    %p77 = scmp.ne.s32.totalorder %s68, %s69
    %p78 = scmp.eq.s32.totalorder %s16, 0
    %p79 = por %p77, %p78
    %p80 = scmp.ne.s32.totalorder %s68, %s69
    %p81 = scmp.eq.s32.totalorder %s17, 3
    %p82 = por %p80, %p81
    %p84 = scmp.ne.s32.totalorder %s69, %s83
    %p85 = scmp.eq.s32.totalorder %s17, 0
    %p86 = por %p84, %p85
    %s88 = sadd.s32 %s87, 1
    %p91 = scmp.eq.s32.totalorder %s11, 3
    %p92 = scmp.ne.s32.totalorder %s87, %s89
    %p93 = scmp.eq.s32.totalorder %s11, 0
    %p94 = por %p92, %p93
    %p95 = scmp.ne.s32.totalorder %s87, %s89
    %p96 = scmp.eq.s32.totalorder %s16, 3
    %p97 = por %p95, %p96
    %p98 = scmp.ne.s32.totalorder %s89, %s90
    %p99 = scmp.eq.s32.totalorder %s16, 0
    %p100 = por %p98, %p99
    %p101 = scmp.ne.s32.totalorder %s89, %s90
    %p102 = scmp.eq.s32.totalorder %s17, 3
    %p103 = por %p101, %p102
    %p105 = scmp.ne.s32.totalorder %s90, %s104
    %p106 = scmp.eq.s32.totalorder %s17, 0
    %p107 = por %p105, %p106
    %s109 = sadd.s32 %s108, 1
    %p112 = scmp.eq.s32.totalorder %s11, 3
    %p113 = scmp.ne.s32.totalorder %s108, %s110
    %p114 = scmp.eq.s32.totalorder %s11, 0
    %p115 = por %p113, %p114
    %p116 = scmp.ne.s32.totalorder %s108, %s110
    %p117 = scmp.eq.s32.totalorder %s16, 3
    %p118 = por %p116, %p117
    %p119 = scmp.ne.s32.totalorder %s110, %s111
    %p120 = scmp.eq.s32.totalorder %s16, 0
    %p121 = por %p119, %p120
    %p122 = scmp.ne.s32.totalorder %s110, %s111
    %p123 = scmp.eq.s32.totalorder %s17, 3
    %p124 = por %p122, %p123
    %p126 = scmp.ne.s32.totalorder %s111, %s125
    %p127 = scmp.eq.s32.totalorder %s17, 0
    %p128 = por %p126, %p127
    %s129 = ssub.s32 %s11, %s18
    %p130 = scmp.eq.s32.totalorder %s129, 0
    %s132 = sadd.s32 %s131, 1
    %s133 = scalar_select %p130, %s131, %s132
    %p136 = pneg %p130
    %p137 = scmp.eq.s32.totalorder %s11, 3
    %p138 = por %p136, %p137
    %p139 = scmp.ne.s32.totalorder %s131, %s134
    %p140 = scmp.eq.s32.totalorder %s11, 0
    %p141 = por %p139, %p140
    %p142 = scmp.ne.s32.totalorder %s131, %s134
    %p143 = scmp.eq.s32.totalorder %s16, 3
    %p144 = por %p142, %p143
    %p145 = scmp.ne.s32.totalorder %s134, %s135
    %p146 = scmp.eq.s32.totalorder %s16, 0
    %p147 = por %p145, %p146
    %p148 = scmp.ne.s32.totalorder %s134, %s135
    %p149 = scmp.eq.s32.totalorder %s17, 3
    %p150 = por %p148, %p149
    %p152 = scmp.ne.s32.totalorder %s135, %s151
    %p153 = scmp.eq.s32.totalorder %s17, 0
    %p154 = por %p152, %p153
    %p155 = scmp.le.s32.totalorder 1, %s11
    %p156 = scmp.lt.s32.totalorder %s11, 5
    %p157 = pnand %p155, %p156
    %p158 = pneg %p157
    // Predicated region
    $region9: #{attention2d.1} parent=5 // pred_check
      _
    $region10: #{attention2d.1} parent=5 // pred_check_branch
      %160 = sbr.rel (%p157) target = $region12
    $region11: #{attention2d.1} parent=5 // pred_region
      %s161 = ssub.s32 %s11, 1
      // Predicated region
      $region13: #{attention2d.1} parent=11 // pred_check
        %p162 = pneg %p58
      $region14: #{attention2d.1} parent=11 // pred_check_branch
        %164 = sbr.rel (%p162) target = $region16
      $region15: #{attention2d.1} parent=11 // pred_region
        _
      $region16: #{attention2d.1} parent=11 // pred_fallthru
        _
      // Predicated region
      $region17: #{attention2d.1} parent=11 // pred_check
        %p165 = pneg %p79
      $region18: #{attention2d.1} parent=11 // pred_check_branch
        %167 = sbr.rel (%p165) target = $region20
      $region19: #{attention2d.1} parent=11 // pred_region
        _
      $region20: #{attention2d.1} parent=11 // pred_fallthru
        _
      // Predicated region
      $region21: #{attention2d.1} parent=11 // pred_check
        %p168 = pneg %p100
      $region22: #{attention2d.1} parent=11 // pred_check_branch
        %170 = sbr.rel (%p168) target = $region24
      $region23: #{attention2d.1} parent=11 // pred_region
        _
      $region24: #{attention2d.1} parent=11 // pred_fallthru
        _
      // Predicated region
      $region25: #{attention2d.1} parent=11 // pred_check
        %p171 = pneg %p121
      $region26: #{attention2d.1} parent=11 // pred_check_branch
        %173 = sbr.rel (%p171) target = $region28
      $region27: #{attention2d.1} parent=11 // pred_region
        _
      $region28: #{attention2d.1} parent=11 // pred_fallthru
        _
    $region12: #{attention2d.1} parent=5 // pred_fallthru
      _
    %p174 = scmp.lt.s32.totalorder %s11, 4
    // Predicated region
    $region29: #{attention2d.1} parent=5 // pred_check
      %p175 = pneg %p174
    $region30: #{attention2d.1} parent=5 // pred_check_branch
      %177 = sbr.rel (%p175) target = $region32
    $region31: #{attention2d.1} parent=5 // pred_region
      // Predicated region
      $region33: #{attention2d.1} parent=31 // pred_check
        %p178 = pneg %p31
      $region34: #{attention2d.1} parent=31 // pred_check_branch
        %180 = sbr.rel (%p178) target = $region36
      $region35: #{attention2d.1} parent=31 // pred_region
        %p181 = scmp.lt.s32.totalorder %s11, 3
        %s182 = scalar_select %p181, %s11, 3
        %s183 = smul.addr %s182, 2
        %s184 = smul.addr %s183, 2
        %s185 = scalar_lea.vmem %s0, %s184
      $region36: #{attention2d.1} parent=31 // pred_fallthru
        _
    $region32: #{attention2d.1} parent=5 // pred_fallthru
      _
    %p186 = scmp.le.s32.totalorder 1, %s11
    %p187 = scmp.lt.s32.totalorder %s11, 5
    %p188 = pnand %p186, %p187
    %p189 = pneg %p188
    // Predicated region
    $region37: #{attention2d.1} parent=5 // pred_check
      _
    $region38: #{attention2d.1} parent=5 // pred_check_branch
      %191 = sbr.rel (%p188) target = $region40
    $region39: #{attention2d.1} parent=5 // pred_region
      %s192 = ssub.s32 %s11, 1
      %p193 = scmp.lt.s32.totalorder %s16, 3
      %s194 = scalar_select %p193, %s16, 3
      %s195 = smul.addr %s194, 2
      %s196 = smul.addr %s195, 2
      %s197 = scalar_lea.vmem %s0, %s196
      %p198 = pneg %p37
      %p199 = pneg %p34
      %p200 = pneg %p58
      %p201 = pneg %p55
      %p202 = pneg %p79
      %p203 = pneg %p76
      %p204 = pneg %p100
      %p205 = pneg %p97
      %p206 = pneg %p121
      %p207 = pneg %p118
      %p208 = pneg %p147
      %p209 = pneg %p144
      %p210 = scmp.lt.s32.totalorder %s16, 3
      %s211 = scalar_select %p210, %s16, 3
      %s212 = smul.addr %s211, 2
      %s213 = smul.addr %s212, 8
      %s214 = scalar_lea.vmem %s5, %s213
      %p215 = scmp.lt.s32.totalorder %s16, 3
      %s216 = scalar_select %p215, %s16, 3
      %s217 = smul.addr %s216, 2
      %s218 = smul.addr %s217, 2
      %s219 = scalar_lea.vmem %s0, %s218
      %p220 = scmp.lt.s32.totalorder %s16, 3
      %s221 = scalar_select %p220, %s16, 3
      %s222 = smul.addr %s221, 2
      %s223 = smul.addr %s222, 8
      %s224 = scalar_lea.vmem %s5, %s223
      %v226 = vld [vmem:[%s219] sm:$0xf]
      %v227 = vld [vmem:[%s1] sm:$0xf]
      %s228 = scalar_lea.vmem %s1, 4
      %v229 = vld [vmem:[%s228] sm:$0xf]
      %v232 = vunpack.c.l.s4 1983009808
      %v233 = vunpack.c.0.s8 %v232
      %v234 = vlaneseq
      %v235 = vshrl.u32 %v234, 7
      %v236 = vsub.s32 %v233, %v235
      %v237 = vrot.slane %v226, %v236
      %v238 = vcombine.high %v237, %v237
      %239 = vrot.lane.b32.xlu0 %v237, 120
      %v240 = vpop.permute.xlu0 %239
      %241 = vrot.lane.b32.xlu0 %v238, 120
      %v242 = vpop.permute.xlu0 %241
      %vm243 = vcmask 982016
      %v244 = vsel %vm243, %v240, %v242
      %vm245 = vcmask 31744
      %v247 = vsel %vm245, %v229, 0
      %vm249 = vcmask 1041408
      %v251 = vsel %vm249, %v244, 0
      %v254 = vsel %vm249, %v242, 0
      %256 = vmatprep.subr.bf16.mxu0 %v254
      %257 = vmatpush1.bf16.msra.mxu0 %v251
      %258 = vmatprep.subr.bf16.mxu0 0
      %259 = vmatpush1.bf16.msra.mxu0 0
      %260 = vmatprep.subr.bf16.mxu0 0
      %261 = vmatpush1.bf16.msra.mxu0 0
      %262 = vmatprep.subr.bf16.mxu0 0
      %263 = vmatpush1.bf16.msra.mxu0 0
      %264 = vmatprep.subr.bf16.mxu0 0
      %265 = vmatpush1.bf16.msra.mxu0 0
      %266 = vmatprep.subr.bf16.mxu0 0
      %267 = vmatpush1.bf16.msra.mxu0 0
      %268 = vmatprep.subr.bf16.mxu0 0
      %269 = vmatpush1.bf16.msra.mxu0 0
      %270 = vmatprep.subr.bf16.mxu0 0
      %271 = vmatpush1.bf16.msra.mxu0 0
      %272 = vmatprep.subr.bf16.mxu0 0
      %273 = vmatpush1.bf16.msra.mxu0 0
      %274 = vmatprep.subr.bf16.mxu0 0
      %275 = vmatpush1.bf16.msra.mxu0 0
      %276 = vmatprep.subr.bf16.mxu0 0
      %277 = vmatpush1.bf16.msra.mxu0 0
      %278 = vmatprep.subr.bf16.mxu0 0
      %279 = vmatpush1.bf16.msra.mxu0 0
      %280 = vmatprep.subr.bf16.mxu0 0
      %281 = vmatpush1.bf16.msra.mxu0 0
      %282 = vmatprep.subr.bf16.mxu0 0
      %283 = vmatpush1.bf16.msra.mxu0 0
      %284 = vmatprep.subr.bf16.mxu0 0
      %285 = vmatpush1.bf16.msra.mxu0 0
      %286 = vmatprep.subr.bf16.mxu0 0
      %287 = vmatpush1.bf16.msra.mxu0 0
      %288 = vmatprep.mubr.bf16.mxu0 0
      %289 = vmatmul.mubr.bf16.gmra.mrb[0].mxu0 %v247
      %v290 = vpop.f32.mrb[0].mxu0
      %v291 = vadd.f32 0.0, %v290
      %v292 = vpop.f32.mrb[0].mxu0
      %v293 = vadd.f32 0.0, %v292
      %v294 = vpop.f32.mrb[0].mxu0
      %v295 = vpop.f32.mrb[0].mxu0
      %296 = vdwg.mxu0
      %297 = vrot.lane.b32.xlu0 %v237, 121
      %v298 = vpop.permute.xlu0 %297
      %299 = vrot.lane.b32.xlu0 %v238, 121
      %v300 = vpop.permute.xlu0 %299
      %vm301 = vcmask 990208
      %v302 = vsel %vm301, %v298, %v300
      %v304 = vsel %vm245, %v227, 0
      %v307 = vsel %vm249, %v302, 0
      %v310 = vsel %vm249, %v300, 0
      %312 = vmatprep.subr.bf16.mxu0 %v310
      %313 = vmatpush1.bf16.msra.mxu0 %v307
      %314 = vmatprep.subr.bf16.mxu0 0
      %315 = vmatpush1.bf16.msra.mxu0 0
      %316 = vmatprep.subr.bf16.mxu0 0
      %317 = vmatpush1.bf16.msra.mxu0 0
      %318 = vmatprep.subr.bf16.mxu0 0
      %319 = vmatpush1.bf16.msra.mxu0 0
      %320 = vmatprep.subr.bf16.mxu0 0
      %321 = vmatpush1.bf16.msra.mxu0 0
      %322 = vmatprep.subr.bf16.mxu0 0
      %323 = vmatpush1.bf16.msra.mxu0 0
      %324 = vmatprep.subr.bf16.mxu0 0
      %325 = vmatpush1.bf16.msra.mxu0 0
      %326 = vmatprep.subr.bf16.mxu0 0
      %327 = vmatpush1.bf16.msra.mxu0 0
      %328 = vmatprep.subr.bf16.mxu0 0
      %329 = vmatpush1.bf16.msra.mxu0 0
      %330 = vmatprep.subr.bf16.mxu0 0
      %331 = vmatpush1.bf16.msra.mxu0 0
      %332 = vmatprep.subr.bf16.mxu0 0
      %333 = vmatpush1.bf16.msra.mxu0 0
      %334 = vmatprep.subr.bf16.mxu0 0
      %335 = vmatpush1.bf16.msra.mxu0 0
      %336 = vmatprep.subr.bf16.mxu0 0
      %337 = vmatpush1.bf16.msra.mxu0 0
      %338 = vmatprep.subr.bf16.mxu0 0
      %339 = vmatpush1.bf16.msra.mxu0 0
      %340 = vmatprep.subr.bf16.mxu0 0
      %341 = vmatpush1.bf16.msra.mxu0 0
      %342 = vmatprep.subr.bf16.mxu0 0
      %343 = vmatpush1.bf16.msra.mxu0 0
      %344 = vmatprep.mubr.bf16.mxu0 0
      %345 = vmatmul.mubr.bf16.gmra.mrb[0].mxu0 %v304
      %v346 = vpop.f32.mrb[0].mxu0
      %v347 = vadd.f32 %v291, %v346
      %v348 = vpop.f32.mrb[0].mxu0
      %v349 = vadd.f32 %v293, %v348
      %v350 = vpop.f32.mrb[0].mxu0
      %v351 = vpop.f32.mrb[0].mxu0
      %352 = vdwg.mxu0
      %s353 = scalar_lea.vmem %s1, 8
      %v354 = vld [vmem:[%s353] sm:$0xf]
      %355 = vrot.lane.b32.xlu0 %v237, 119
      %v356 = vpop.permute.xlu0 %355
      %357 = vrot.lane.b32.xlu0 %v238, 119
      %v358 = vpop.permute.xlu0 %357
      %vm359 = vcmask 973824
      %v360 = vsel %vm359, %v356, %v358
      %v362 = vsel %vm245, %v354, 0
      %v365 = vsel %vm249, %v360, 0
      %v368 = vsel %vm249, %v358, 0
      %370 = vmatprep.subr.bf16.mxu0 %v368
      %371 = vmatpush1.bf16.msra.mxu0 %v365
      %372 = vmatprep.subr.bf16.mxu0 0
      %373 = vmatpush1.bf16.msra.mxu0 0
      %374 = vmatprep.subr.bf16.mxu0 0
      %375 = vmatpush1.bf16.msra.mxu0 0
      %376 = vmatprep.subr.bf16.mxu0 0
      %377 = vmatpush1.bf16.msra.mxu0 0
      %378 = vmatprep.subr.bf16.mxu0 0
      %379 = vmatpush1.bf16.msra.mxu0 0
      %380 = vmatprep.subr.bf16.mxu0 0
      %381 = vmatpush1.bf16.msra.mxu0 0
      %382 = vmatprep.subr.bf16.mxu0 0
      %383 = vmatpush1.bf16.msra.mxu0 0
      %384 = vmatprep.subr.bf16.mxu0 0
      %385 = vmatpush1.bf16.msra.mxu0 0
      %386 = vmatprep.subr.bf16.mxu0 0
      %387 = vmatpush1.bf16.msra.mxu0 0
      %388 = vmatprep.subr.bf16.mxu0 0
      %389 = vmatpush1.bf16.msra.mxu0 0
      %390 = vmatprep.subr.bf16.mxu0 0
      %391 = vmatpush1.bf16.msra.mxu0 0
      %392 = vmatprep.subr.bf16.mxu0 0
      %393 = vmatpush1.bf16.msra.mxu0 0
      %394 = vmatprep.subr.bf16.mxu0 0
      %395 = vmatpush1.bf16.msra.mxu0 0
      %396 = vmatprep.subr.bf16.mxu0 0
      %397 = vmatpush1.bf16.msra.mxu0 0
      %398 = vmatprep.subr.bf16.mxu0 0
      %399 = vmatpush1.bf16.msra.mxu0 0
      %400 = vmatprep.subr.bf16.mxu0 0
      %401 = vmatpush1.bf16.msra.mxu0 0
      %402 = vmatprep.mubr.bf16.mxu0 0
      %403 = vmatmul.mubr.bf16.gmra.mrb[0].mxu0 %v362
      %v404 = vpop.f32.mrb[0].mxu0
      %v405 = vadd.f32 0.0, %v404
      %v406 = vpop.f32.mrb[0].mxu0
      %v407 = vadd.f32 0.0, %v406
      %v408 = vpop.f32.mrb[0].mxu0
      %v409 = vpop.f32.mrb[0].mxu0
      %410 = vdwg.mxu0
      %v411 = vadd.f32 %v347, %v405
      %v412 = vadd.f32 %v349, %v407
      %s413 = scalar_lea.vmem %s1, 12
      %v414 = vld [vmem:[%s413] sm:$0xf]
      %415 = vrot.lane.b32.xlu0 %v237, 103
      %v416 = vpop.permute.xlu0 %415
      %417 = vrot.lane.b32.xlu0 %v238, 103
      %v418 = vpop.permute.xlu0 %417
      %vm419 = vcmask 842752
      %v420 = vsel %vm419, %v416, %v418
      %v422 = vsel %vm245, %v414, 0
      %v425 = vsel %vm249, %v420, 0
      %v428 = vsel %vm249, %v418, 0
      %430 = vmatprep.subr.bf16.mxu0 %v428
      %431 = vmatpush1.bf16.msra.mxu0 %v425
      %432 = vmatprep.subr.bf16.mxu0 0
      %433 = vmatpush1.bf16.msra.mxu0 0
      %434 = vmatprep.subr.bf16.mxu0 0
      %435 = vmatpush1.bf16.msra.mxu0 0
      %436 = vmatprep.subr.bf16.mxu0 0
      %437 = vmatpush1.bf16.msra.mxu0 0
      %438 = vmatprep.subr.bf16.mxu0 0
      %439 = vmatpush1.bf16.msra.mxu0 0
      %440 = vmatprep.subr.bf16.mxu0 0
      %441 = vmatpush1.bf16.msra.mxu0 0
      %442 = vmatprep.subr.bf16.mxu0 0
      %443 = vmatpush1.bf16.msra.mxu0 0
      %444 = vmatprep.subr.bf16.mxu0 0
      %445 = vmatpush1.bf16.msra.mxu0 0
      %446 = vmatprep.subr.bf16.mxu0 0
      %447 = vmatpush1.bf16.msra.mxu0 0
      %448 = vmatprep.subr.bf16.mxu0 0
      %449 = vmatpush1.bf16.msra.mxu0 0
      %450 = vmatprep.subr.bf16.mxu0 0
      %451 = vmatpush1.bf16.msra.mxu0 0
      %452 = vmatprep.subr.bf16.mxu0 0
      %453 = vmatpush1.bf16.msra.mxu0 0
      %454 = vmatprep.subr.bf16.mxu0 0
      %455 = vmatpush1.bf16.msra.mxu0 0
      %456 = vmatprep.subr.bf16.mxu0 0
      %457 = vmatpush1.bf16.msra.mxu0 0
      %458 = vmatprep.subr.bf16.mxu0 0
      %459 = vmatpush1.bf16.msra.mxu0 0
      %460 = vmatprep.subr.bf16.mxu0 0
      %461 = vmatpush1.bf16.msra.mxu0 0
      %462 = vmatprep.mubr.bf16.mxu0 0
      %463 = vmatmul.mubr.bf16.gmra.mrb[0].mxu0 %v422
      %v464 = vpop.f32.mrb[0].mxu0
      %v465 = vadd.f32 0.0, %v464
      %v466 = vpop.f32.mrb[0].mxu0
      %v467 = vadd.f32 0.0, %v466
      %v468 = vpop.f32.mrb[0].mxu0
      %v469 = vpop.f32.mrb[0].mxu0
      %470 = vdwg.mxu0
      %v471 = vadd.f32 %v411, %v465
      %v472 = vadd.f32 %v412, %v467
      %s473 = scalar_lea.vmem %s1, 16
      %v474 = vld [vmem:[%s473] sm:$0xf]
      %475 = vrot.lane.b32.xlu0 %v237, 102
      %v476 = vpop.permute.xlu0 %475
      %477 = vrot.lane.b32.xlu0 %v238, 102
      %v478 = vpop.permute.xlu0 %477
      %vm479 = vcmask 834560
      %v480 = vsel %vm479, %v476, %v478
      %v482 = vsel %vm245, %v474, 0
      %v485 = vsel %vm249, %v480, 0
      %v488 = vsel %vm249, %v478, 0
      %490 = vmatprep.subr.bf16.mxu0 %v488
      %491 = vmatpush1.bf16.msra.mxu0 %v485
      %492 = vmatprep.subr.bf16.mxu0 0
      %493 = vmatpush1.bf16.msra.mxu0 0
      %494 = vmatprep.subr.bf16.mxu0 0
      %495 = vmatpush1.bf16.msra.mxu0 0
      %496 = vmatprep.subr.bf16.mxu0 0
      %497 = vmatpush1.bf16.msra.mxu0 0
      %498 = vmatprep.subr.bf16.mxu0 0
      %499 = vmatpush1.bf16.msra.mxu0 0
      %500 = vmatprep.subr.bf16.mxu0 0
      %501 = vmatpush1.bf16.msra.mxu0 0
      %502 = vmatprep.subr.bf16.mxu0 0
      %503 = vmatpush1.bf16.msra.mxu0 0
      %504 = vmatprep.subr.bf16.mxu0 0
      %505 = vmatpush1.bf16.msra.mxu0 0
      %506 = vmatprep.subr.bf16.mxu0 0
      %507 = vmatpush1.bf16.msra.mxu0 0
      %508 = vmatprep.subr.bf16.mxu0 0
      %509 = vmatpush1.bf16.msra.mxu0 0
      %510 = vmatprep.subr.bf16.mxu0 0
      %511 = vmatpush1.bf16.msra.mxu0 0
      %512 = vmatprep.subr.bf16.mxu0 0
      %513 = vmatpush1.bf16.msra.mxu0 0
      %514 = vmatprep.subr.bf16.mxu0 0
      %515 = vmatpush1.bf16.msra.mxu0 0
      %516 = vmatprep.subr.bf16.mxu0 0
      %517 = vmatpush1.bf16.msra.mxu0 0
      %518 = vmatprep.subr.bf16.mxu0 0
      %519 = vmatpush1.bf16.msra.mxu0 0
      %520 = vmatprep.subr.bf16.mxu0 0
      %521 = vmatpush1.bf16.msra.mxu0 0
      %522 = vmatprep.mubr.bf16.mxu0 0
      %523 = vmatmul.mubr.bf16.gmra.mrb[0].mxu0 %v482
      %v524 = vpop.f32.mrb[0].mxu0
      %v525 = vadd.f32 0.0, %v524
      %v526 = vpop.f32.mrb[0].mxu0
      %v527 = vadd.f32 0.0, %v526
      %v528 = vpop.f32.mrb[0].mxu0
      %v529 = vpop.f32.mrb[0].mxu0
      %530 = vdwg.mxu0
      %v531 = vadd.f32 %v471, %v525
      %v532 = vadd.f32 %v472, %v527
      %s533 = scalar_lea.vmem %s1, 20
      %v534 = vld [vmem:[%s533] sm:$0xf]
      %535 = vrot.lane.b32.xlu0 %v237, 101
      %v536 = vpop.permute.xlu0 %535
      %537 = vrot.lane.b32.xlu0 %v238, 101
      %v538 = vpop.permute.xlu0 %537
      %vm539 = vcmask 826368
      %v540 = vsel %vm539, %v536, %v538
      %v542 = vsel %vm245, %v534, 0
      %v545 = vsel %vm249, %v540, 0
      %v548 = vsel %vm249, %v538, 0
      %550 = vmatprep.subr.bf16.mxu0 %v548
      %551 = vmatpush1.bf16.msra.mxu0 %v545
      %552 = vmatprep.subr.bf16.mxu0 0
      %553 = vmatpush1.bf16.msra.mxu0 0
      %554 = vmatprep.subr.bf16.mxu0 0
      %555 = vmatpush1.bf16.msra.mxu0 0
      %556 = vmatprep.subr.bf16.mxu0 0
      %557 = vmatpush1.bf16.msra.mxu0 0
      %558 = vmatprep.subr.bf16.mxu0 0
      %559 = vmatpush1.bf16.msra.mxu0 0
      %560 = vmatprep.subr.bf16.mxu0 0
      %561 = vmatpush1.bf16.msra.mxu0 0
      %562 = vmatprep.subr.bf16.mxu0 0
      %563 = vmatpush1.bf16.msra.mxu0 0
      %564 = vmatprep.subr.bf16.mxu0 0
      %565 = vmatpush1.bf16.msra.mxu0 0
      %566 = vmatprep.subr.bf16.mxu0 0
      %567 = vmatpush1.bf16.msra.mxu0 0
      %568 = vmatprep.subr.bf16.mxu0 0
      %569 = vmatpush1.bf16.msra.mxu0 0
      %570 = vmatprep.subr.bf16.mxu0 0
      %571 = vmatpush1.bf16.msra.mxu0 0
      %572 = vmatprep.subr.bf16.mxu0 0
      %573 = vmatpush1.bf16.msra.mxu0 0
      %574 = vmatprep.subr.bf16.mxu0 0
      %575 = vmatpush1.bf16.msra.mxu0 0
      %576 = vmatprep.subr.bf16.mxu0 0
      %577 = vmatpush1.bf16.msra.mxu0 0
      %578 = vmatprep.subr.bf16.mxu0 0
      %579 = vmatpush1.bf16.msra.mxu0 0
      %580 = vmatprep.subr.bf16.mxu0 0
      %581 = vmatpush1.bf16.msra.mxu0 0
      %582 = vmatprep.mubr.bf16.mxu0 0
      %583 = vmatmul.mubr.bf16.gmra.mrb[0].mxu0 %v542
      %v584 = vpop.f32.mrb[0].mxu0
      %v585 = vadd.f32 0.0, %v584
      %v586 = vpop.f32.mrb[0].mxu0
      %v587 = vadd.f32 0.0, %v586
      %v588 = vpop.f32.mrb[0].mxu0
      %v589 = vpop.f32.mrb[0].mxu0
      %590 = vdwg.mxu0
      %v591 = vadd.f32 %v531, %v585
      %v592 = vadd.f32 %v532, %v587
      %s593 = scalar_lea.vmem %s1, 24
      %v594 = vld [vmem:[%s593] sm:$0xf]
      %595 = vrot.lane.b32.xlu0 %v237, 85
      %v596 = vpop.permute.xlu0 %595
      %597 = vrot.lane.b32.xlu0 %v238, 85
      %v598 = vpop.permute.xlu0 %597
      %vm599 = vcmask 695296
      %v600 = vsel %vm599, %v596, %v598
      %v602 = vsel %vm245, %v594, 0
      %v605 = vsel %vm249, %v600, 0
      %v608 = vsel %vm249, %v598, 0
      %610 = vmatprep.subr.bf16.mxu0 %v608
      %611 = vmatpush1.bf16.msra.mxu0 %v605
      %612 = vmatprep.subr.bf16.mxu0 0
      %613 = vmatpush1.bf16.msra.mxu0 0
      %614 = vmatprep.subr.bf16.mxu0 0
      %615 = vmatpush1.bf16.msra.mxu0 0
      %616 = vmatprep.subr.bf16.mxu0 0
      %617 = vmatpush1.bf16.msra.mxu0 0
      %618 = vmatprep.subr.bf16.mxu0 0
      %619 = vmatpush1.bf16.msra.mxu0 0
      %620 = vmatprep.subr.bf16.mxu0 0
      %621 = vmatpush1.bf16.msra.mxu0 0
      %622 = vmatprep.subr.bf16.mxu0 0
      %623 = vmatpush1.bf16.msra.mxu0 0
      %624 = vmatprep.subr.bf16.mxu0 0
      %625 = vmatpush1.bf16.msra.mxu0 0
      %626 = vmatprep.subr.bf16.mxu0 0
      %627 = vmatpush1.bf16.msra.mxu0 0
      %628 = vmatprep.subr.bf16.mxu0 0
      %629 = vmatpush1.bf16.msra.mxu0 0
      %630 = vmatprep.subr.bf16.mxu0 0
      %631 = vmatpush1.bf16.msra.mxu0 0
      %632 = vmatprep.subr.bf16.mxu0 0
      %633 = vmatpush1.bf16.msra.mxu0 0
      %634 = vmatprep.subr.bf16.mxu0 0
      %635 = vmatpush1.bf16.msra.mxu0 0
      %636 = vmatprep.subr.bf16.mxu0 0
      %637 = vmatpush1.bf16.msra.mxu0 0
      %638 = vmatprep.subr.bf16.mxu0 0
      %639 = vmatpush1.bf16.msra.mxu0 0
      %640 = vmatprep.subr.bf16.mxu0 0
      %641 = vmatpush1.bf16.msra.mxu0 0
      %642 = vmatprep.mubr.bf16.mxu0 0
      %643 = vmatmul.mubr.bf16.gmra.mrb[0].mxu0 %v602
      %v644 = vpop.f32.mrb[0].mxu0
      %v645 = vadd.f32 0.0, %v644
      %v646 = vpop.f32.mrb[0].mxu0
      %v647 = vadd.f32 0.0, %v646
      %v648 = vpop.f32.mrb[0].mxu0
      %v649 = vpop.f32.mrb[0].mxu0
      %650 = vdwg.mxu0
      %v651 = vadd.f32 %v591, %v645
      %v652 = vadd.f32 %v592, %v647
      %s653 = scalar_lea.vmem %s1, 28
      %v654 = vld [vmem:[%s653] sm:$0xf]
      %655 = vrot.lane.b32.xlu0 %v237, 84
      %v656 = vpop.permute.xlu0 %655
      %657 = vrot.lane.b32.xlu0 %v238, 84
      %v658 = vpop.permute.xlu0 %657
      %vm659 = vcmask 687104
      %v660 = vsel %vm659, %v656, %v658
      %v662 = vsel %vm245, %v654, 0
      %v665 = vsel %vm249, %v660, 0
      %v668 = vsel %vm249, %v658, 0
      %670 = vmatprep.subr.bf16.mxu0 %v668
      %671 = vmatpush1.bf16.msra.mxu0 %v665
      %672 = vmatprep.subr.bf16.mxu0 0
      %673 = vmatpush1.bf16.msra.mxu0 0
      %674 = vmatprep.subr.bf16.mxu0 0
      %675 = vmatpush1.bf16.msra.mxu0 0
      %676 = vmatprep.subr.bf16.mxu0 0
      %677 = vmatpush1.bf16.msra.mxu0 0
      %678 = vmatprep.subr.bf16.mxu0 0
      %679 = vmatpush1.bf16.msra.mxu0 0
      %680 = vmatprep.subr.bf16.mxu0 0
      %681 = vmatpush1.bf16.msra.mxu0 0
      %682 = vmatprep.subr.bf16.mxu0 0
      %683 = vmatpush1.bf16.msra.mxu0 0
      %684 = vmatprep.subr.bf16.mxu0 0
      %685 = vmatpush1.bf16.msra.mxu0 0
      %686 = vmatprep.subr.bf16.mxu0 0
      %687 = vmatpush1.bf16.msra.mxu0 0
      %688 = vmatprep.subr.bf16.mxu0 0
      %689 = vmatpush1.bf16.msra.mxu0 0
      %690 = vmatprep.subr.bf16.mxu0 0
      %691 = vmatpush1.bf16.msra.mxu0 0
      %692 = vmatprep.subr.bf16.mxu0 0
      %693 = vmatpush1.bf16.msra.mxu0 0
      %694 = vmatprep.subr.bf16.mxu0 0
      %695 = vmatpush1.bf16.msra.mxu0 0
      %696 = vmatprep.subr.bf16.mxu0 0
      %697 = vmatpush1.bf16.msra.mxu0 0
      %698 = vmatprep.subr.bf16.mxu0 0
      %699 = vmatpush1.bf16.msra.mxu0 0
      %700 = vmatprep.subr.bf16.mxu0 0
      %701 = vmatpush1.bf16.msra.mxu0 0
      %702 = vmatprep.mubr.bf16.mxu0 0
      %703 = vmatmul.mubr.bf16.gmra.mrb[0].mxu0 %v662
      %v704 = vpop.f32.mrb[0].mxu0
      %v705 = vadd.f32 0.0, %v704
      %v706 = vpop.f32.mrb[0].mxu0
      %v707 = vadd.f32 0.0, %v706
      %v708 = vpop.f32.mrb[0].mxu0
      %v709 = vpop.f32.mrb[0].mxu0
      %710 = vdwg.mxu0
      %v711 = vadd.f32 %v651, %v705
      %v712 = vadd.f32 %v652, %v707
      %s713 = scalar_lea.vmem %s1, 32
      %v714 = vld [vmem:[%s713] sm:$0xf]
      %715 = vrot.lane.b32.xlu0 %v237, 83
      %v716 = vpop.permute.xlu0 %715
      %717 = vrot.lane.b32.xlu0 %v238, 83
      %v718 = vpop.permute.xlu0 %717
      %vm719 = vcmask 678912
      %v720 = vsel %vm719, %v716, %v718
      %v722 = vsel %vm245, %v714, 0
      %v725 = vsel %vm249, %v720, 0
      %v728 = vsel %vm249, %v718, 0
      %730 = vmatprep.subr.bf16.mxu0 %v728
      %731 = vmatpush1.bf16.msra.mxu0 %v725
      %732 = vmatprep.subr.bf16.mxu0 0
      %733 = vmatpush1.bf16.msra.mxu0 0
      %734 = vmatprep.subr.bf16.mxu0 0
      %735 = vmatpush1.bf16.msra.mxu0 0
      %736 = vmatprep.subr.bf16.mxu0 0
      %737 = vmatpush1.bf16.msra.mxu0 0
      %738 = vmatprep.subr.bf16.mxu0 0
      %739 = vmatpush1.bf16.msra.mxu0 0
      %740 = vmatprep.subr.bf16.mxu0 0
      %741 = vmatpush1.bf16.msra.mxu0 0
      %742 = vmatprep.subr.bf16.mxu0 0
      %743 = vmatpush1.bf16.msra.mxu0 0
      %744 = vmatprep.subr.bf16.mxu0 0
      %745 = vmatpush1.bf16.msra.mxu0 0
      %746 = vmatprep.subr.bf16.mxu0 0
      %747 = vmatpush1.bf16.msra.mxu0 0
      %748 = vmatprep.subr.bf16.mxu0 0
      %749 = vmatpush1.bf16.msra.mxu0 0
      %750 = vmatprep.subr.bf16.mxu0 0
      %751 = vmatpush1.bf16.msra.mxu0 0
      %752 = vmatprep.subr.bf16.mxu0 0
      %753 = vmatpush1.bf16.msra.mxu0 0
      %754 = vmatprep.subr.bf16.mxu0 0
      %755 = vmatpush1.bf16.msra.mxu0 0
      %756 = vmatprep.subr.bf16.mxu0 0
      %757 = vmatpush1.bf16.msra.mxu0 0
      %758 = vmatprep.subr.bf16.mxu0 0
      %759 = vmatpush1.bf16.msra.mxu0 0
      %760 = vmatprep.subr.bf16.mxu0 0
      %761 = vmatpush1.bf16.msra.mxu0 0
      %762 = vmatprep.mubr.bf16.mxu0 0
      %763 = vmatmul.mubr.bf16.gmra.mrb[0].mxu0 %v722
      %v764 = vpop.f32.mrb[0].mxu0
      %v765 = vadd.f32 0.0, %v764
      %v766 = vpop.f32.mrb[0].mxu0
      %v767 = vadd.f32 0.0, %v766
      %v768 = vpop.f32.mrb[0].mxu0
      %v769 = vpop.f32.mrb[0].mxu0
      %770 = vdwg.mxu0
      %v771 = vadd.f32 %v711, %v765
      %v772 = vadd.f32 %v712, %v767
      %v773 = vld [vmem:[%s3] sm:$0xff]
      %775 = vset.pattern.permute.xlu0 0
      %776 = vperm.xlu0 %775, %v773
      %v777 = vpop.permute.xlu0 %776
      %v779 = vadd.f32 %v771, %v777
      %v780 = vadd.f32 %v772, %v777
      %v781 = vmax.f32 %v779, 0.0
      %v782 = vmax.f32 %v780, 0.0
      %v783 = vld [vmem:[%s2] sm:$0xff]
      %v784 = vld [vmem:[%s4] sm:$0xff]
      %786 = vset.pattern.permute.xlu0 0
      %787 = vperm.xlu0 %786, %v784
      %v788 = vpop.permute.xlu0 %787
      %vm790 = vcmask 64512
      %v792 = vsel %vm790, %v783, 0
      %794 = vmatprep.subr.mxu0 %v782
      %795 = vmatpush1.msra.mxu0 %v781
      %796 = vmatprep.subr.mxu0 0.0
      %797 = vmatpush1.msra.mxu0 0.0
      %798 = vmatprep.subr.mxu0 0.0
      %799 = vmatpush1.msra.mxu0 0.0
      %800 = vmatprep.subr.mxu0 0.0
      %801 = vmatpush1.msra.mxu0 0.0
      %802 = vmatprep.subr.mxu0 0.0
      %803 = vmatpush1.msra.mxu0 0.0
      %804 = vmatprep.subr.mxu0 0.0
      %805 = vmatpush1.msra.mxu0 0.0
      %806 = vmatprep.subr.mxu0 0.0
      %807 = vmatpush1.msra.mxu0 0.0
      %808 = vmatprep.subr.mxu0 0.0
      %809 = vmatpush1.msra.mxu0 0.0
      %810 = vmatprep.subr.mxu0 0.0
      %811 = vmatpush1.msra.mxu0 0.0
      %812 = vmatprep.subr.mxu0 0.0
      %813 = vmatpush1.msra.mxu0 0.0
      %814 = vmatprep.subr.mxu0 0.0
      %815 = vmatpush1.msra.mxu0 0.0
      %816 = vmatprep.subr.mxu0 0.0
      %817 = vmatpush1.msra.mxu0 0.0
      %818 = vmatprep.subr.mxu0 0.0
      %819 = vmatpush1.msra.mxu0 0.0
      %820 = vmatprep.subr.mxu0 0.0
      %821 = vmatpush1.msra.mxu0 0.0
      %822 = vmatprep.subr.mxu0 0.0
      %823 = vmatpush1.msra.mxu0 0.0
      %824 = vmatprep.subr.mxu0 0.0
      %825 = vmatpush1.msra.mxu0 0.0
      %826 = vmatprep.subr.mxu0 0.0
      %827 = vmatpush1.msra.mxu0 0.0
      %828 = vmatprep.subr.mxu0 0.0
      %829 = vmatpush1.msra.mxu0 0.0
      %830 = vmatprep.subr.mxu0 0.0
      %831 = vmatpush1.msra.mxu0 0.0
      %832 = vmatprep.subr.mxu0 0.0
      %833 = vmatpush1.msra.mxu0 0.0
      %834 = vmatprep.subr.mxu0 0.0
      %835 = vmatpush1.msra.mxu0 0.0
      %836 = vmatprep.subr.mxu0 0.0
      %837 = vmatpush1.msra.mxu0 0.0
      %838 = vmatprep.subr.mxu0 0.0
      %839 = vmatpush1.msra.mxu0 0.0
      %840 = vmatprep.subr.mxu0 0.0
      %841 = vmatpush1.msra.mxu0 0.0
      %842 = vmatprep.subr.mxu0 0.0
      %843 = vmatpush1.msra.mxu0 0.0
      %844 = vmatprep.subr.mxu0 0.0
      %845 = vmatpush1.msra.mxu0 0.0
      %846 = vmatprep.subr.mxu0 0.0
      %847 = vmatpush1.msra.mxu0 0.0
      %848 = vmatprep.subr.mxu0 0.0
      %849 = vmatpush1.msra.mxu0 0.0
      %850 = vmatprep.subr.mxu0 0.0
      %851 = vmatpush1.msra.mxu0 0.0
      %852 = vmatprep.subr.mxu0 0.0
      %853 = vmatpush1.msra.mxu0 0.0
      %854 = vmatprep.subr.mxu0 0.0
      %855 = vmatpush1.msra.mxu0 0.0
      %856 = vmatprep.subr.mxu0 0.0
      %857 = vmatpush1.msra.mxu0 0.0
      %858 = vmatprep.mubr.f32.mxu0 0.0
      %859 = vmatmul.mubr.f32.gmra.mrb[0].mxu0 %v792
      %v860 = vpop.f32.mrb[0].mxu0
      %v861 = vadd.f32 %v788, %v860
      %v862 = vpop.f32.mrb[0].mxu0
      %v863 = vadd.f32 %v788, %v862
      %864 = vdwg.mxu0
      %v865 = vxor.u32 %v861, 2147483648
      %v866 = vxor.u32 %v863, 2147483648
      %v867 = vmul.f32 %v865, 1.442695
      %v868 = vpow.pop %v867
      %v869 = vmul.f32 %v866, 1.442695
      %v870 = vpow.pop %v869
      %v871 = vadd.f32 %v868, 1.0
      %v872 = vadd.f32 %v870, 1.0
      %v873 = vrcp.pop %v871
      %v874 = vmul.f32 1.0, %v873
      %v875 = vrcp.pop %v872
      %v876 = vmul.f32 1.0, %v875
      %v877 = vadd.f32 %v874, 1.0
      %v878 = vadd.f32 %v876, 1.0
      %879 = vst [vmem:[%s224] sm:$0xff] %v877
      %vm880 = vcmask 130048
      %881 = vst.msk [vmem:[%s224 + $0x8] sm:$0xff] %vm880, %v878
      %p882 = scmp.lt.s32.totalorder %s16, 3
      %s883 = scalar_select %p882, %s16, 3
      %s884 = smul.addr %s883, 2
      %s885 = smul.addr %s884, 8
      %s886 = scalar_lea.vmem %s5, %s885
      // Predicated region
      $region41: #{attention2d.1} parent=39 // pred_check
        %p887 = pneg %p144
      $region42: #{attention2d.1} parent=39 // pred_check_branch
        %889 = sbr.rel (%p887) target = $region44
      $region43: #{attention2d.1} parent=39 // pred_region
        _
      $region44: #{attention2d.1} parent=39 // pred_fallthru
        _
    $region40: #{attention2d.1} parent=5 // pred_fallthru
      _
    %p890 = scmp.le.s32.totalorder 2, %s11
    // Predicated region
    $region45: #{attention2d.1} parent=5 // pred_check
      %p891 = pneg %p890
    $region46: #{attention2d.1} parent=5 // pred_check_branch
      %893 = sbr.rel (%p891) target = $region48
    $region47: #{attention2d.1} parent=5 // pred_region
      %s894 = ssub.s32 %s11, 2
      // Predicated region
      $region49: #{attention2d.1} parent=47 // pred_check
        %p895 = pneg %p150
      $region50: #{attention2d.1} parent=47 // pred_check_branch
        %897 = sbr.rel (%p895) target = $region52
      $region51: #{attention2d.1} parent=47 // pred_region
        %p898 = scmp.lt.s32.totalorder %s17, 3
        %s899 = scalar_select %p898, %s17, 3
        %s900 = smul.addr %s899, 2
        %s901 = smul.addr %s900, 8
        %s902 = scalar_lea.vmem %s5, %s901
      $region52: #{attention2d.1} parent=47 // pred_fallthru
        _
    $region48: #{attention2d.1} parent=5 // pred_fallthru
      _
  $region6: #{attention2d.1} parent=0 // loop_footer
    %s15 = sadd.s32 1, %s11
  $region7: #{attention2d.1} parent=0 // loop_footer_branch
    %10 = sbr.rel target = $region3
  $region8: #{attention2d.1} parent=0 // loop_exit
    _

</llo_original>
